<compile_context>
chip_gen: v6e
topology: v6e:2x2x1
jax: 0.10.0
libtpu: 0.0.40
codegen_flags: <defaults>
</compile_context>

<pallas_src>
import math

import jax
import jax.numpy as jnp
from jax.experimental import pallas as pl
from jax.experimental.pallas import tpu as pltpu


def _round_up(x, m):
    return ((x + m - 1) // m) * m


# ----------------------------------------------------------------------------
# Pallas kernel: transposed conv-as-matmul with K-tiled f32 accumulator + fused bias
# ----------------------------------------------------------------------------
def _gconv_matmul_kernel(w_ref, x_ref, b_ref, o_ref, acc_ref):
    # w_ref: (Ct, kt) bf16, x_ref: (kt, tm) bf16, b_ref: (Ct, 1) f32,
    # o_ref: (Ct, tm) f32, acc_ref: (Ct, tm) f32 scratch.
    k = pl.program_id(1)

    @pl.when(k == 0)
    def _():
        acc_ref[...] = jnp.zeros_like(acc_ref)

    acc_ref[...] += jnp.dot(w_ref[...], x_ref[...],
                            preferred_element_type=jnp.float32)

    @pl.when(k == pl.num_programs(1) - 1)
    def _():
        o_ref[...] = (acc_ref[...] + b_ref[...]).astype(o_ref.dtype)


def gconv_matmul_t(w_2d, x_t, bias_col, *, tm=None, out_dtype=jnp.float32):
    """out_t[Ct, M] = W[Ct, K] @ X^T[K, M] + bias[Ct, 1] on the MXU (lane-dense output)."""
    Ct, K = w_2d.shape
    K2, M = x_t.shape
    assert K == K2

    if tm is None:
        # Lane tile: 512 when M is large (better HBM roofline), else 256 so the parallel
        # M axis still has >= 2 grid steps (keeps both v7x TensorCores busy at toy sizes).
        tm = 512 if M >= 1024 else 256

    # Pad Ct / K to bf16 sublane-packing multiples (16), M to the lane tile.
    Ct_pad = _round_up(Ct, 16)
    if K <= 2048:
        kt = _round_up(K, 16)
        K_pad = kt
    else:
        kt = 512
        K_pad = _round_up(K, kt)
    M_pad = _round_up(M, tm)

    if (Ct_pad, K_pad) != (Ct, K):
        w_2d = jnp.pad(w_2d, ((0, Ct_pad - Ct), (0, K_pad - K)))
    if (K_pad, M_pad) != (K, M):
        x_t = jnp.pad(x_t, ((0, K_pad - K), (0, M_pad - M)))
    if Ct_pad != Ct:
        bias_col = jnp.pad(bias_col, ((0, Ct_pad - Ct), (0, 0)))

    nm, nk = M_pad // tm, K_pad // kt

    flops = 2 * M_pad * K_pad * Ct_pad
    bytes_accessed = int(x_t.size * x_t.dtype.itemsize
                         + w_2d.size * w_2d.dtype.itemsize
                         + bias_col.size * bias_col.dtype.itemsize
                         + Ct_pad * M_pad * jnp.dtype(out_dtype).itemsize)

    out = pl.pallas_call(
        _gconv_matmul_kernel,
        out_shape=jax.ShapeDtypeStruct((Ct_pad, M_pad), out_dtype),
        grid_spec=pltpu.PrefetchScalarGridSpec(
            num_scalar_prefetch=0,
            grid=(nm, nk),                                         # reduction axis last
            in_specs=[
                pl.BlockSpec((Ct_pad, kt), lambda i, k: (0, k)),   # weight K-tile
                pl.BlockSpec((kt, tm), lambda i, k: (k, i)),       # X^T tile (M on lanes)
                pl.BlockSpec((Ct_pad, 1), lambda i, k: (0, 0)),    # bias column (resident)
            ],
            out_specs=pl.BlockSpec((Ct_pad, tm), lambda i, k: (0, i)),
            scratch_shapes=[pltpu.VMEM((Ct_pad, tm), jnp.float32)],
        ),
        compiler_params=pltpu.CompilerParams(
            dimension_semantics=("parallel", "arbitrary"),
            vmem_limit_bytes=32 * 1024 * 1024,
            allow_input_fusion=[False, True, False],   # let XLA fuse the im2col gather in
        ),
        cost_estimate=pl.CostEstimate(
            flops=flops, transcendentals=0, bytes_accessed=bytes_accessed),
    )(w_2d, x_t, bias_col)

    return out[:Ct, :M]


# ----------------------------------------------------------------------------
# GConv2d module (parameter setup + layout glue in plain JAX)
# ----------------------------------------------------------------------------
class GConv2d:
    def __init__(self, in_channels, out_channels, kernel_size, group_kernel_size,
                 groups=1, stride=1, padding=0, dilation=1, bias=True, key=None):
        assert in_channels % groups == 0 and out_channels % groups == 0
        assert groups == 1, "this synthetic kernel implements groups=1 (as used below)"
        self.in_channels = in_channels
        self.out_channels = out_channels
        self.kernel_size = kernel_size
        self.group_kernel_size = group_kernel_size
        self.groups = groups
        self.stride = (stride, stride) if isinstance(stride, int) else stride
        self.padding = (padding, padding) if isinstance(padding, int) else padding
        self.dilation = (dilation, dilation) if isinstance(dilation, int) else dilation

        key = jax.random.PRNGKey(0) if key is None else key
        k1, k2 = jax.random.split(key)
        fan_in = (in_channels // groups) * group_kernel_size * kernel_size[0] * kernel_size[1]
        bound = 1.0 / math.sqrt(fan_in)
        # Base spatial kernel (deterministic init; mirrors kernel.reset_parameters()).
        self.base_weight = jax.random.uniform(
            k1, (out_channels, in_channels // groups, *kernel_size),
            minval=-bound, maxval=bound, dtype=jnp.float32)
        if bias:
            # PyTorch bias shape for conv_mode='2d' is (out_channels, 1, 1, 1).
            self.bias = jax.random.uniform(
                k2, (out_channels, 1, 1, 1), minval=-bound, maxval=bound, dtype=jnp.float32)
        else:
            self.bias = None

    def sample_kernel(self, in_H, out_H):
        # TODO(synk): the real GroupKernel resamples the base filter under the group action
        # of (in_H, out_H); a deterministic cosine modulation over the group-element "angles"
        # is used as a synthetic stand-in with the correct shape.
        mod = 1.0 + 0.5 * jnp.cos(out_H[:, None] - in_H[None, :])  # (num_out_H, num_in_H)
        w = (self.base_weight[:, None, :, None, :, :] *
             mod[None, :, None, :, None, None])
        # -> (Cout, num_out_H, Cin//groups, num_in_H, Kh, Kw)
        return w

    def __call__(self, x, in_H, out_H):
        N, Cin, num_in_H, H, W = x.shape
        num_out_H = out_H.shape[0]
        Cout = self.out_channels
        Kh, Kw = self.kernel_size
        (sh, sw), (ph, pw), (dh, dw) = self.stride, self.padding, self.dilation

        weight = self.sample_kernel(in_H, out_H)
        Cin_t, Cout_t, KK = Cin * num_in_H, Cout * num_out_H, Kh * Kw
        # weight.reshape(Cout_t, Cin_t, Kh, Kw) flattened to (Cout_t, Cin_t*KK); K index is
        # cin_t-major, tap-minor — the X^T build below matches this ordering.
        w_2d = weight.reshape(Cout_t, Cin_t * KK)

        x_flat = x.reshape(N, Cin_t, H, W)
        Ho = (H + 2 * ph - dh * (Kh - 1) - 1) // sh + 1
        Wo = (W + 2 * pw - dw * (Kw - 1) - 1) // sw + 1

        # im2col glue built directly in transposed (K, M) layout so the Pallas output
        # [Cout_t, M] has the large M dimension on the lane axis (lane-dense stores).
        # allow_input_fusion lets XLA fuse this gather into the pallas_call operand.
        # TODO(synk): for production shapes, move the Kh*Kw tap loop inside the kernel
        # (halo'd spatial tiles) to fully remove the im2col read amplification.
        xp = jnp.pad(x_flat, ((0, 0), (0, 0), (ph, ph), (pw, pw)))
        taps = []
        for ky in range(Kh):
            for kx in range(Kw):
                ys, xs = ky * dh, kx * dw
                taps.append(xp[:, :, ys: ys + (Ho - 1) * sh + 1: sh,
                                     xs: xs + (Wo - 1) * sw + 1: sw])
        stacked = jnp.stack(taps, axis=0)                      # (KK, N, Cin_t, Ho, Wo)
        M = N * Ho * Wo
        x_t = (stacked.transpose(2, 0, 1, 3, 4)                # (Cin_t, KK, N, Ho, Wo)
               .reshape(Cin_t * KK, M))                        # (K, M)

        # bf16 MXU inputs, f32 accumulation inside the kernel.
        x_t = x_t.astype(jnp.bfloat16)
        w_2d = w_2d.astype(jnp.bfloat16)

        if self.bias is not None:
            bias_col = jnp.repeat(self.bias.reshape(Cout), num_out_H).reshape(Cout_t, 1)
        else:
            bias_col = jnp.zeros((Cout_t, 1), dtype=jnp.float32)
        bias_col = bias_col.astype(jnp.float32)

        out_t = gconv_matmul_t(w_2d, x_t, bias_col, out_dtype=jnp.float32)   # (Cout_t, M)
        out = (out_t.reshape(Cout, num_out_H, N, Ho, Wo)
               .transpose(2, 0, 1, 3, 4))                      # (N, Cout, num_out_H, Ho, Wo)
        return out, out_H


# ----------------------------------------------------------------------------
# Main: build inputs, run, verify against lax.conv_general_dilated reference
# ----------------------------------------------------------------------------
if __name__ == "__main__":
    key = jax.random.PRNGKey(0)
    kx, kp = jax.random.split(key)

    N, Cin, Cout = 2, 4, 4
    num_in_H = num_out_H = 4          # e.g. C4 rotation group elements
    H = W = 16
    kernel_size = (3, 3)

    x = jax.random.normal(kx, (N, Cin, num_in_H, H, W), dtype=jnp.float32)
    # group elements represented as angles (synthetic)
    in_H = jnp.linspace(0.0, 2.0 * math.pi, num_in_H, endpoint=False)
    out_H = jnp.linspace(0.0, 2.0 * math.pi, num_out_H, endpoint=False)

    conv = GConv2d(Cin, Cout, kernel_size, group_kernel_size=num_in_H,
                   groups=1, stride=1, padding=1, dilation=1, bias=True, key=kp)

    out, out_H_ret = conv(x, in_H, out_H)
    out = jax.block_until_ready(out)

    # Reference: XLA convolution over the same bf16-rounded operands, f32 accumulation.
    weight = conv.sample_kernel(in_H, out_H)
    w_flat = weight.reshape(Cout * num_out_H, Cin * num_in_H, *kernel_size).astype(jnp.bfloat16)
    x_flat = x.reshape(N, Cin * num_in_H, H, W).astype(jnp.bfloat16)
    ref = jax.lax.conv_general_dilated(
        x_flat, w_flat, window_strides=(1, 1), padding=((1, 1), (1, 1)),
        dimension_numbers=("NCHW", "OIHW", "NCHW"),
        preferred_element_type=jnp.float32)
    ref = ref.reshape(N, Cout, num_out_H, H, W) + conv.bias.reshape(1, Cout, 1, 1, 1)

    assert out.shape == (N, Cout, num_out_H, H, W), out.shape
    max_err = float(jnp.max(jnp.abs(out - ref)))
    assert jnp.allclose(out, ref, atol=1e-2, rtol=1e-2), max_err
    assert jnp.array_equal(out_H_ret, out_H)
    print("KERNEL_OK")
</pallas_src>

<mosaic_0001>
module attributes {stable_mosaic.version = 11 : i64} {
  func.func @_gconv_matmul_kernel(%arg0: i32, %arg1: i32, %arg2: memref<16x144xbf16, #tpu.memory_space<vmem>>, %arg3: memref<144x256xbf16, #tpu.memory_space<vmem>>, %arg4: memref<16x1xf32, #tpu.memory_space<vmem>>, %arg5: memref<16x256xf32, #tpu.memory_space<vmem>>, %arg6: memref<16x256xf32, #tpu.memory_space<vmem>>) attributes {dimension_semantics = [#tpu.dimension_semantics<parallel>, #tpu.dimension_semantics<arbitrary>], iteration_bounds = array<i64: 2, 1>, scalar_prefetch = 0 : i64, scratch_operands = 1 : i64, tpu.core_type = #tpu.core_type<tc>, window_params = [{transform_indices = @transform_0, window_bounds = array<i64: 16, 144>}, {transform_indices = @transform_1, window_bounds = array<i64: 144, 256>}, {pipeline_mode = #tpu.pipeline_mode<synchronous>, transform_indices = @transform_2, window_bounds = array<i64: 16, 1>}, {transform_indices = @transform_3, window_bounds = array<i64: 16, 256>}]} {
    %c0_i32 = arith.constant 0 : i32
    %0 = arith.cmpi eq, %arg1, %c0_i32 : i32
    %1 = arith.extui %0 : i1 to i32
    %c0_i32_0 = arith.constant 0 : i32
    %2 = arith.cmpi ne, %1, %c0_i32_0 : i32
    scf.if %2 {
      %cst_10 = arith.constant 0.000000e+00 : f32
      %12 = vector.broadcast %cst_10 : f32 to vector<16x256xf32>
      %c0_11 = arith.constant 0 : index
      %c0_12 = arith.constant 0 : index
      %13 = vector.load %arg6[%c0_11, %c0_12] : memref<16x256xf32, #tpu.memory_space<vmem>>, vector<16x256xf32>
      tpu.vector_store %arg6[%c0_11, %c0_12], %12 {strides = array<i32>} : memref<16x256xf32, #tpu.memory_space<vmem>>, vector<16x256xf32>,
    } else {
    }
    %c0 = arith.constant 0 : index
    %c0_1 = arith.constant 0 : index
    %3 = vector.load %arg6[%c0, %c0_1] : memref<16x256xf32, #tpu.memory_space<vmem>>, vector<16x256xf32>
    %c0_2 = arith.constant 0 : index
    %c0_3 = arith.constant 0 : index
    %4 = vector.load %arg2[%c0_2, %c0_3] : memref<16x144xbf16, #tpu.memory_space<vmem>>, vector<16x144xbf16>
    %c0_4 = arith.constant 0 : index
    %c0_5 = arith.constant 0 : index
    %5 = vector.load %arg3[%c0_4, %c0_5] : memref<144x256xbf16, #tpu.memory_space<vmem>>, vector<144x256xbf16>
    %cst = arith.constant dense<0.000000e+00> : vector<16x256xf32>
    %6 = tpu.matmul %4, %5, %cst {dimension_numbers = #tpu.dot_dimension_numbers<[1], [0], [0], [1], [0, 0, 1, 1], [], []>} : vector<16x144xbf16>, vector<144x256xbf16>, vector<16x256xf32> -> vector<16x256xf32>
    %7 = arith.addf %3, %6 : vector<16x256xf32>
    %c0_6 = arith.constant 0 : index
    %c0_7 = arith.constant 0 : index
    %8 = vector.load %arg6[%c0_6, %c0_7] : memref<16x256xf32, #tpu.memory_space<vmem>>, vector<16x256xf32>
    tpu.vector_store %arg6[%c0_6, %c0_7], %7 {strides = array<i32>} : memref<16x256xf32, #tpu.memory_space<vmem>>, vector<16x256xf32>,
    %c0_i32_8 = arith.constant 0 : i32
    %9 = arith.cmpi eq, %arg1, %c0_i32_8 : i32
    %10 = arith.extui %9 : i1 to i32
    %c0_i32_9 = arith.constant 0 : i32
    %11 = arith.cmpi ne, %10, %c0_i32_9 : i32
    scf.if %11 {
      %c0_10 = arith.constant 0 : index
      %c0_11 = arith.constant 0 : index
      %12 = vector.load %arg6[%c0_10, %c0_11] : memref<16x256xf32, #tpu.memory_space<vmem>>, vector<16x256xf32>
      %c0_12 = arith.constant 0 : index
      %c0_13 = arith.constant 0 : index
      %13 = vector.load %arg4[%c0_12, %c0_13] : memref<16x1xf32, #tpu.memory_space<vmem>>, vector<16x1xf32>
      %14 = vector.broadcast %13 : vector<16x1xf32> to vector<16x256xf32>
      %15 = arith.addf %12, %14 : vector<16x256xf32>
      %c0_14 = arith.constant 0 : index
      %c0_15 = arith.constant 0 : index
      %16 = vector.load %arg5[%c0_14, %c0_15] : memref<16x256xf32, #tpu.memory_space<vmem>>, vector<16x256xf32>
      tpu.vector_store %arg5[%c0_14, %c0_15], %15 {strides = array<i32>} : memref<16x256xf32, #tpu.memory_space<vmem>>, vector<16x256xf32>,
    } else {
    }
    return
  }
  func.func @transform_0(%arg0: i32, %arg1: i32) -> (i32, i32) {
    %c0_i32 = arith.constant 0 : i32
    %c0_i32_0 = arith.constant 0 : i32
    return %c0_i32, %arg1 : i32, i32
  }
  func.func @transform_1(%arg0: i32, %arg1: i32) -> (i32, i32) {
    %c0_i32 = arith.constant 0 : i32
    return %arg1, %arg0 : i32, i32
  }
  func.func @transform_2(%arg0: i32, %arg1: i32) -> (i32, i32) {
    %c0_i32 = arith.constant 0 : i32
    %c0_i32_0 = arith.constant 0 : i32
    %c0_i32_1 = arith.constant 0 : i32
    return %c0_i32, %c0_i32_0 : i32, i32
  }
  func.func @transform_3(%arg0: i32, %arg1: i32) -> (i32, i32) {
    %c0_i32 = arith.constant 0 : i32
    %c0_i32_0 = arith.constant 0 : i32
    return %c0_i32, %arg0 : i32, i32
  }
}

</mosaic_0001>

<llo_original>
// kernel: tpu_custom_call.1
$region0: #{tpu_custom_call.1}
  #allocation0 [shape = 'u32[]', space=smem, size = 0x4, offset = 0x4, fixed_abs, tag = 'smem constant byte address 0x4 - core index']
  #allocation1 [shape = 'u32[144,128]{1,0:T(1,128)}', space=vmem, size = 0x12000, scoped, tag = 'internal scratch']
  #allocation2 [shape = 'f32[16,256]{1,0:T(8,128)}', space=vmem, size = 0x4000, scoped, tag = 'scratch operand']
  %s0 = inlined_call_operand.vmem [shape: bf16[16,144], index: 0, kind: input, shape index: {}]
  %s1 = inlined_call_operand.hbm [shape: bf16[144,512], index: 1, kind: input, shape index: {}]
  %s2 = inlined_call_operand.vmem [shape: f32[16,1], index: 2, kind: input, shape index: {}]
  %s3 = inlined_call_operand.hbm [shape: f32[16,512], index: 3, kind: output, shape index: {}]
  %s4 = sld [smem:[#allocation0]]
  $region57: #{tpu_custom_call.1} parent=0
    _
  %s6 = ssub.s32 1, %s4
  %s7 = scalar_select 0, %s6, %s4
  $region1: #{tpu_custom_call.1} parent=0
    #allocation3 [shape = 'u8[147456]{0}', space=vmem, size = 0x24000, scoped, tag = 'input window, operand 1']
    #allocation4 [shape = 's32[2]{0}', space=sflag, size = 0x8, scoped, tag = 'scoped memory for tpu_custom_call.1']
    #allocation5 [shape = 's32[2]{0}', space=sflag, size = 0x8, scoped, tag = 'scoped memory for tpu_custom_call.1']
    #allocation6 [shape = 'u8[32768]{0}', space=vmem, size = 0x8000, scoped, tag = 'output window, operand 0']
    %8 = vsyncpa [#allocation4], 0
    %s9 = scalar_lea.sflag [#allocation4], 1
    %10 = vsyncpa %s9, 0
    %11 = vsyncpa [#allocation5], 0
    %s12 = scalar_lea.sflag [#allocation5], 1
    %13 = vsyncpa %s12, 0
    loop: start=0, step=1, limit=4
    $region2: #{tpu_custom_call.1} parent=1 // loop_pre_header
      _
    $region3: #{tpu_custom_call.1} parent=1 // loop_header
      %s15 = sphi 0, %s19
      %p16 = scmp.ge.s32.totalorder %s15, 4
      %s22 = sphi 0, %s34
      %s23 = sphi 0, %s30
      %s24 = sphi 0, %s22
      %s25 = sphi 0, %s23
      %s26 = sphi 0, %s24
      %s27 = sphi 0, %s25
      %s37 = sphi 0, %s39
      %s40 = sphi 0, %s37
      %s41 = sphi 0, %s40
      %s57 = sphi 0, %s41
      %s65 = sphi 0, %s67
      %s68 = sphi 0, %s65
      %s69 = sphi 0, %s68
      %s85 = sphi 0, %s69
      %s89 = sphi 0, %s89
      %s91 = sphi 0, %s89
      %s92 = sphi 0, %s91
      %s106 = sphi 0, %s92
      %s112 = sphi 0, %s114
      %s115 = sphi 0, %s112
      %s116 = sphi 0, %s115
      %s132 = sphi 0, %s116
    $region4: #{tpu_custom_call.1} parent=1 // loop_header_branch
      %18 = sbr.rel (%p16) target = $region8
    $region5: #{tpu_custom_call.1} parent=1 // loop_body
      %s20 = ssub.s32 %s15, 1
      %s21 = ssub.s32 %s15, 2
      %s28 = sadd.s32 1, %s23
      %p29 = scmp.ge.s32.totalorder %s28, 1
      %s30 = scalar_select %p29, 0, %s28
      %s31 = sadd.s32 1, %s22
      %s32 = scalar_select %p29, %s31, %s22
      %p33 = scmp.ge.s32.totalorder %s32, 2
      %s34 = scalar_select %p33, 0, %s32
      %s35 = ssub.s32 %s23, %s30
      %p36 = scmp.eq.s32.totalorder %s35, 0
      %s38 = sadd.s32 %s37, 1
      %s39 = scalar_select %p36, %s37, %s38
      %p42 = pneg %p36
      %p43 = scmp.eq.s32.totalorder %s15, 1
      %p44 = por %p42, %p43
      %p45 = scmp.ne.s32.totalorder %s37, %s40
      %p46 = scmp.eq.s32.totalorder %s15, 0
      %p47 = por %p45, %p46
      %p48 = scmp.ne.s32.totalorder %s37, %s40
      %p49 = scmp.eq.s32.totalorder %s20, 1
      %p50 = por %p48, %p49
      %p51 = scmp.ne.s32.totalorder %s40, %s41
      %p52 = scmp.eq.s32.totalorder %s20, 0
      %p53 = por %p51, %p52
      %p54 = scmp.ne.s32.totalorder %s40, %s41
      %p55 = scmp.eq.s32.totalorder %s21, 1
      %p56 = por %p54, %p55
      %p58 = scmp.ne.s32.totalorder %s41, %s57
      %p59 = scmp.eq.s32.totalorder %s21, 0
      %p60 = por %p58, %p59
      %s61 = ssub.s32 %s23, %s30
      %s62 = ssub.s32 %s22, %s34
      %s63 = sor.u32 %s61, %s62
      %p64 = scmp.eq.s32.totalorder %s63, 0
      %s66 = sadd.s32 %s65, 1
      %s67 = scalar_select %p64, %s65, %s66
      %p70 = pneg %p64
      %p71 = scmp.eq.s32.totalorder %s15, 1
      %p72 = por %p70, %p71
      %p73 = scmp.ne.s32.totalorder %s65, %s68
      %p74 = scmp.eq.s32.totalorder %s15, 0
      %p75 = por %p73, %p74
      %p76 = scmp.ne.s32.totalorder %s65, %s68
      %p77 = scmp.eq.s32.totalorder %s20, 1
      %p78 = por %p76, %p77
      %p79 = scmp.ne.s32.totalorder %s68, %s69
      %p80 = scmp.eq.s32.totalorder %s20, 0
      %p81 = por %p79, %p80
      %p82 = scmp.ne.s32.totalorder %s68, %s69
      %p83 = scmp.eq.s32.totalorder %s21, 1
      %p84 = por %p82, %p83
      %p86 = scmp.ne.s32.totalorder %s69, %s85
      %p87 = scmp.eq.s32.totalorder %s21, 0
      %p88 = por %p86, %p87
      %s90 = sadd.s32 %s89, 1
      %p93 = scmp.eq.s32.totalorder %s15, 1
      %p94 = scmp.ne.s32.totalorder %s89, %s91
      %p95 = scmp.eq.s32.totalorder %s15, 0
      %p96 = por %p94, %p95
      %p97 = scmp.ne.s32.totalorder %s89, %s91
      %p98 = scmp.eq.s32.totalorder %s20, 1
      %p99 = por %p97, %p98
      %p100 = scmp.ne.s32.totalorder %s91, %s92
      %p101 = scmp.eq.s32.totalorder %s20, 0
      %p102 = por %p100, %p101
      %p103 = scmp.ne.s32.totalorder %s91, %s92
      %p104 = scmp.eq.s32.totalorder %s21, 1
      %p105 = por %p103, %p104
      %p107 = scmp.ne.s32.totalorder %s92, %s106
      %p108 = scmp.eq.s32.totalorder %s21, 0
      %p109 = por %p107, %p108
      %s110 = ssub.s32 %s22, %s34
      %p111 = scmp.eq.s32.totalorder %s110, 0
      %s113 = sadd.s32 %s112, 1
      %s114 = scalar_select %p111, %s112, %s113
      %p117 = pneg %p111
      %p118 = scmp.eq.s32.totalorder %s15, 1
      %p119 = por %p117, %p118
      %p120 = scmp.ne.s32.totalorder %s112, %s115
      %p121 = scmp.eq.s32.totalorder %s15, 0
      %p122 = por %p120, %p121
      %p123 = scmp.ne.s32.totalorder %s112, %s115
      %p124 = scmp.eq.s32.totalorder %s20, 1
      %p125 = por %p123, %p124
      %p126 = scmp.ne.s32.totalorder %s115, %s116
      %p127 = scmp.eq.s32.totalorder %s20, 0
      %p128 = por %p126, %p127
      %p129 = scmp.ne.s32.totalorder %s115, %s116
      %p130 = scmp.eq.s32.totalorder %s21, 1
      %p131 = por %p129, %p130
      %p133 = scmp.ne.s32.totalorder %s116, %s132
      %p134 = scmp.eq.s32.totalorder %s21, 0
      %p135 = por %p133, %p134
      %p136 = scmp.le.s32.totalorder 1, %s15
      %p137 = scmp.lt.s32.totalorder %s15, 3
      %p138 = pnand %p136, %p137
      %p139 = pneg %p138
      // Predicated region
      $region9: #{tpu_custom_call.1} parent=5 // pred_check
        _
      $region10: #{tpu_custom_call.1} parent=5 // pred_check_branch
        %141 = sbr.rel (%p138) target = $region12
      $region11: #{tpu_custom_call.1} parent=5 // pred_region
        %s142 = ssub.s32 %s15, 1
        // Predicated region
        $region13: #{tpu_custom_call.1} parent=11 // pred_check
          %p143 = pneg %p53
        $region14: #{tpu_custom_call.1} parent=11 // pred_check_branch
          %145 = sbr.rel (%p143) target = $region16
        $region15: #{tpu_custom_call.1} parent=11 // pred_region
          %s146 = smul.u32 2, %s25
          %p147 = scmp.lt.s32.totalorder %s146, 1
          %s148 = scalar_select %p147, %s146, 1
          %s149 = smul.addr %s148, 4
          %s150 = scalar_lea.vmem %s0, %s149
          %s151 = smul.u32 2, %s25
        $region16: #{tpu_custom_call.1} parent=11 // pred_fallthru
          _
        // Predicated region
        $region17: #{tpu_custom_call.1} parent=11 // pred_check
          %p152 = pneg %p102
        $region18: #{tpu_custom_call.1} parent=11 // pred_check_branch
          %154 = sbr.rel (%p152) target = $region20
        $region19: #{tpu_custom_call.1} parent=11 // pred_region
          _
        $region20: #{tpu_custom_call.1} parent=11 // pred_fallthru
          _
      $region12: #{tpu_custom_call.1} parent=5 // pred_fallthru
        _
      %p155 = scmp.lt.s32.totalorder %s15, 2
      // Predicated region
      $region21: #{tpu_custom_call.1} parent=5 // pred_check
        %p156 = pneg %p155
      $region22: #{tpu_custom_call.1} parent=5 // pred_check_branch
        %158 = sbr.rel (%p156) target = $region24
      $region23: #{tpu_custom_call.1} parent=5 // pred_region
        // Predicated region
        $region25: #{tpu_custom_call.1} parent=23 // pred_check
          %p159 = pneg %p75
        $region26: #{tpu_custom_call.1} parent=23 // pred_check_branch
          %161 = sbr.rel (%p159) target = $region28
        $region27: #{tpu_custom_call.1} parent=23 // pred_region
          %s162 = sand.u32 %s65, 1
          %s163 = scalar_lea.sflag [#allocation4], %s162
          %s164 = sand.u32 %s65, 1
          %s165 = smul.addr %s164, 144
          %s166 = scalar_lea.vmem [#allocation3], %s165
          %s167 = smul.u32 18, %s23
          %s168 = smul.u32 2, %s22
          %s170 = ssub.s32 2304, 2304
          %171 = vsyncadd %s163, %s170
          %s172 = smul.addr %s167, 4
          %s173 = sadd.s32 %s168, %s172
          %s174 = smul.addr %s173, 64
          %s175 = scalar_lea.hbm %s1, %s174
          %s176 = sshll.u32 %s166, 4
          %s177 = int_to_ptr.vmem [resolvable:$true] %s176
          %182 = dma.hbm_to_vmem [thread:$0]  %s175, 2304, %s177, %s163, 256, 128, 8
        $region28: #{tpu_custom_call.1} parent=23 // pred_fallthru
          _
      $region24: #{tpu_custom_call.1} parent=5 // pred_fallthru
        _
      %p183 = scmp.le.s32.totalorder 1, %s15
      %p184 = scmp.lt.s32.totalorder %s15, 3
      %p185 = pnand %p183, %p184
      %p186 = pneg %p185
      // Predicated region
      $region29: #{tpu_custom_call.1} parent=5 // pred_check
        _
      $region30: #{tpu_custom_call.1} parent=5 // pred_check_branch
        %188 = sbr.rel (%p185) target = $region32
      $region31: #{tpu_custom_call.1} parent=5 // pred_region
        %s189 = ssub.s32 %s15, 1
        %s190 = sand.u32 %s68, 1
        %s191 = scalar_lea.sflag [#allocation4], %s190
        %s192 = sand.u32 %s68, 1
        %s193 = smul.addr %s192, 144
        %s194 = scalar_lea.vmem [#allocation3], %s193
        // Predicated region
        $region33: #{tpu_custom_call.1} parent=31 // pred_check
          %p195 = pneg %p81
        $region34: #{tpu_custom_call.1} parent=31 // pred_check_branch
          %197 = sbr.rel (%p195) target = $region36
        $region35: #{tpu_custom_call.1} parent=31 // pred_region
          %198 = dma.done %s191, 2304
        $region36: #{tpu_custom_call.1} parent=31 // pred_fallthru
          _
        %s199 = smul.u32 2, %s25
        %p200 = scmp.lt.s32.totalorder %s199, 1
        %s201 = scalar_select %p200, %s199, 1
        %s202 = smul.addr %s201, 4
        %s203 = scalar_lea.vmem %s0, %s202
        %p204 = pneg %p53
        %p205 = pneg %p50
        %s206 = sand.u32 %s68, 1
        %s207 = scalar_lea.sflag [#allocation4], %s206
        %s208 = sand.u32 %s68, 1
        %s209 = smul.addr %s208, 144
        %s210 = scalar_lea.vmem [#allocation3], %s209
        %p211 = pneg %p81
        %p212 = pneg %p78
        %p213 = pneg %p102
        %p214 = pneg %p99
        %p215 = pneg %p128
        %p216 = pneg %p125
        %s217 = sand.u32 %s115, 1
        %s218 = scalar_lea.sflag [#allocation5], %s217
        %s219 = sand.u32 %s115, 1
        %s220 = smul.addr %s219, 32
        %s221 = scalar_lea.vmem [#allocation6], %s220
        %s222 = smul.u32 2, %s25
        %p223 = scmp.lt.s32.totalorder %s222, 1
        %s224 = scalar_select %p223, %s222, 1
        %s225 = smul.addr %s224, 4
        %s226 = scalar_lea.vmem %s0, %s225
        %s227 = smul.u32 2, %s25
        %s228 = smul.u32 18, %s25
        %s229 = smul.u32 2, %s24
        %s230 = smul.u32 2, %s24
        %p232 = scmp.eq.s32.totalorder %s25, 0
        // Predicated region
        $region37: #{tpu_custom_call.1} parent=31 // pred_check
          %p233 = pneg %p232
        $region38: #{tpu_custom_call.1} parent=31 // pred_check_branch
          %235 = sbr.rel (%p233) target = $region40
        $region39: #{tpu_custom_call.1} parent=31 // pred_region
          %236 = vst [vmem:[#allocation2] sm:$0xff] 0.0
          %237 = vst [vmem:[#allocation2 + $0x8] sm:$0xff] 0.0
          %238 = vst [vmem:[#allocation2 + $0x10] sm:$0xff] 0.0
          %239 = vst [vmem:[#allocation2 + $0x18] sm:$0xff] 0.0
        $region40: #{tpu_custom_call.1} parent=31 // pred_fallthru
          _
        %v240 = vld [vmem:[#allocation2] sm:$0xff]
        %v241 = vld [vmem:[#allocation2 + $0x8] sm:$0xff]
        %v242 = vld [vmem:[#allocation2 + $0x10] sm:$0xff]
        %v243 = vld [vmem:[#allocation2 + $0x18] sm:$0xff]
        %v244 = vld [vmem:[%s226] sm:$0xff]
        %v245 = vld [vmem:[%s226 + $0x8] sm:$0xff]
        %v246 = vld [vmem:[%s194] sm:$0xff]
        %v247 = vld [vmem:[%s194 + $0x8] sm:$0xff]
        %v248 = vld [vmem:[%s194 + $0x10] sm:$0xff]
        %v249 = vld [vmem:[%s194 + $0x18] sm:$0xff]
        %v250 = vld [vmem:[%s194 + $0x20] sm:$0xff]
        %v251 = vld [vmem:[%s194 + $0x28] sm:$0xff]
        %v252 = vld [vmem:[%s194 + $0x30] sm:$0xff]
        %v253 = vld [vmem:[%s194 + $0x38] sm:$0xff]
        %v254 = vld [vmem:[%s194 + $0x40] sm:$0xff]
        %v255 = vld [vmem:[%s194 + $0x48] sm:$0xff]
        %v256 = vld [vmem:[%s194 + $0x50] sm:$0xff]
        %v257 = vld [vmem:[%s194 + $0x58] sm:$0xff]
        %v258 = vld [vmem:[%s194 + $0x60] sm:$0xff]
        %v259 = vld [vmem:[%s194 + $0x68] sm:$0xff]
        %v260 = vld [vmem:[%s194 + $0x70] sm:$0xff]
        %v261 = vld [vmem:[%s194 + $0x78] sm:$0xff]
        %v262 = vld [vmem:[%s194 + $0x80] sm:$0xff]
        %v263 = vld [vmem:[%s194 + $0x88] sm:$0xff]
        %v266 = vunpack.c.l.b16 %v244
        %v267 = vunpack.c.h.b16 %v244
        %v268 = vunpack.c.l.b16 %v245
        %v269 = vunpack.c.h.b16 %v245
        %v270 = vpack.c.b16 %v268, %v266
        %v271 = vpack.c.b16 %v269, %v267
        %v291 = vunpack.c.l.b16 %v246
        %v292 = vunpack.c.h.b16 %v246
        %v293 = vunpack.c.l.b16 %v247
        %v294 = vunpack.c.h.b16 %v247
        %v295 = vunpack.c.l.b16 %v248
        %v296 = vunpack.c.h.b16 %v248
        %v297 = vunpack.c.l.b16 %v249
        %v298 = vunpack.c.h.b16 %v249
        %v299 = vunpack.c.l.b16 %v250
        %v300 = vunpack.c.h.b16 %v250
        %v301 = vunpack.c.l.b16 %v251
        %v302 = vunpack.c.h.b16 %v251
        %v303 = vunpack.c.l.b16 %v252
        %v304 = vunpack.c.h.b16 %v252
        %v305 = vunpack.c.l.b16 %v253
        %v306 = vunpack.c.h.b16 %v253
        %v307 = vunpack.c.l.b16 %v254
        %v308 = vunpack.c.h.b16 %v254
        %v309 = vunpack.c.l.b16 %v255
        %v310 = vunpack.c.h.b16 %v255
        %v311 = vunpack.c.l.b16 %v256
        %v312 = vunpack.c.h.b16 %v256
        %v313 = vunpack.c.l.b16 %v257
        %v314 = vunpack.c.h.b16 %v257
        %v315 = vunpack.c.l.b16 %v258
        %v316 = vunpack.c.h.b16 %v258
        %v317 = vunpack.c.l.b16 %v259
        %v318 = vunpack.c.h.b16 %v259
        %v319 = vunpack.c.l.b16 %v260
        %v320 = vunpack.c.h.b16 %v260
        %v321 = vunpack.c.l.b16 %v261
        %v322 = vunpack.c.h.b16 %v261
        %v323 = vunpack.c.l.b16 %v262
        %v324 = vunpack.c.h.b16 %v262
        %v325 = vunpack.c.l.b16 %v263
        %v326 = vunpack.c.h.b16 %v263
        %v327 = vpack.c.b16 %v293, %v291
        %v328 = vpack.c.b16 %v294, %v292
        %v329 = vpack.c.b16 %v297, %v295
        %v330 = vpack.c.b16 %v298, %v296
        %v331 = vpack.c.b16 %v301, %v299
        %v332 = vpack.c.b16 %v302, %v300
        %v333 = vpack.c.b16 %v305, %v303
        %v334 = vpack.c.b16 %v306, %v304
        %v335 = vpack.c.b16 %v309, %v307
        %v336 = vpack.c.b16 %v310, %v308
        %v337 = vpack.c.b16 %v313, %v311
        %v338 = vpack.c.b16 %v314, %v312
        %v339 = vpack.c.b16 %v317, %v315
        %v340 = vpack.c.b16 %v318, %v316
        %v341 = vpack.c.b16 %v321, %v319
        %v342 = vpack.c.b16 %v322, %v320
        %v343 = vpack.c.b16 %v325, %v323
        %v344 = vpack.c.b16 %v326, %v324
        %vm363 = vcmask 130048
        %v365 = vsel %vm363, %v271, 0
        %367 = vmatprep.subr.bf16.mxu0 %v342
        %368 = vmatpush1.bf16.msra.mxu0 %v341
        %369 = vmatprep.subr.bf16.mxu0 %v340
        %370 = vmatpush1.bf16.msra.mxu0 %v339
        %371 = vmatprep.subr.bf16.mxu0 %v338
        %372 = vmatpush1.bf16.msra.mxu0 %v337
        %373 = vmatprep.subr.bf16.mxu0 %v336
        %374 = vmatpush1.bf16.msra.mxu0 %v335
        %375 = vmatprep.subr.bf16.mxu0 %v334
        %376 = vmatpush1.bf16.msra.mxu0 %v333
        %377 = vmatprep.subr.bf16.mxu0 %v332
        %378 = vmatpush1.bf16.msra.mxu0 %v331
        %379 = vmatprep.subr.bf16.mxu0 %v330
        %380 = vmatpush1.bf16.msra.mxu0 %v329
        %381 = vmatprep.subr.bf16.mxu0 %v328
        %382 = vmatpush1.bf16.msra.mxu0 %v327
        %383 = vmatprep.subr.bf16.mxu0 0
        %384 = vmatpush2.bf16.msra.mxu0 0
        %385 = vmatprep.subr.bf16.mxu0 0
        %386 = vmatpush2.bf16.msra.mxu0 0
        %387 = vmatprep.subr.bf16.mxu0 0
        %388 = vmatpush2.bf16.msra.mxu0 0
        %389 = vmatprep.subr.bf16.mxu0 0
        %390 = vmatpush2.bf16.msra.mxu0 0
        %391 = vmatprep.subr.bf16.mxu0 0
        %392 = vmatpush2.bf16.msra.mxu0 0
        %393 = vmatprep.subr.bf16.mxu0 0
        %394 = vmatpush2.bf16.msra.mxu0 0
        %395 = vmatprep.subr.bf16.mxu0 0
        %396 = vmatpush2.bf16.msra.mxu0 0
        %397 = vmatprep.subr.bf16.mxu0 %v344
        %398 = vmatpush2.bf16.msra.mxu0 %v343
        %399 = vmatprep.mubr.bf16.mxu0 %v365
        %400 = vmatmul.mubr.bf16.gmra.mxu0 %v270
        %v401 = vpop.f32.mrf.mxu0
        %v402 = vadd.f32 0.0, %v401
        %v403 = vpop.f32.mrf.mxu0
        %v404 = vadd.f32 0.0, %v403
        %v405 = vpop.f32.mrf.mxu0
        %v406 = vadd.f32 0.0, %v405
        %v407 = vpop.f32.mrf.mxu0
        %v408 = vadd.f32 0.0, %v407
        %409 = vdwg.mxu0
        %v410 = vadd.f32 %v240, %v402
        %v411 = vadd.f32 %v241, %v404
        %v412 = vadd.f32 %v242, %v406
        %v413 = vadd.f32 %v243, %v408
        %414 = vst [vmem:[#allocation2] sm:$0xff] %v410
        %415 = vst [vmem:[#allocation2 + $0x8] sm:$0xff] %v411
        %416 = vst [vmem:[#allocation2 + $0x10] sm:$0xff] %v412
        %417 = vst [vmem:[#allocation2 + $0x18] sm:$0xff] %v413
        // Predicated region
        $region41: #{tpu_custom_call.1} parent=31 // pred_check
          %p418 = pneg %p232
        $region42: #{tpu_custom_call.1} parent=31 // pred_check_branch
          %420 = sbr.rel (%p418) target = $region44
        $region43: #{tpu_custom_call.1} parent=31 // pred_region
          %v421 = vld [vmem:[#allocation2] sm:$0xff]
          %v422 = vld [vmem:[#allocation2 + $0x8] sm:$0xff]
          %v423 = vld [vmem:[#allocation2 + $0x10] sm:$0xff]
          %v424 = vld [vmem:[#allocation2 + $0x18] sm:$0xff]
          %v425 = vld [vmem:[%s2] sm:$0xff]
          %v426 = vld [vmem:[%s2 + $0x8] sm:$0xff]
          %428 = vset.pattern.permute.xlu0 0
          %429 = vperm.xlu0 %428, %v425
          %v430 = vpop.permute.xlu0 %429
          %433 = vset.pattern.permute.xlu0 0
          %434 = vperm.xlu0 %433, %v426
          %v435 = vpop.permute.xlu0 %434
          %v437 = vadd.f32 %v421, %v430
          %v438 = vadd.f32 %v422, %v430
          %v439 = vadd.f32 %v423, %v435
          %v440 = vadd.f32 %v424, %v435
          %441 = vst [vmem:[%s221] sm:$0xff] %v437
          %442 = vst [vmem:[%s221 + $0x8] sm:$0xff] %v438
          %443 = vst [vmem:[%s221 + $0x10] sm:$0xff] %v439
          %444 = vst [vmem:[%s221 + $0x18] sm:$0xff] %v440
        $region44: #{tpu_custom_call.1} parent=31 // pred_fallthru
          _
        %s445 = sand.u32 %s115, 1
        %s446 = scalar_lea.sflag [#allocation5], %s445
        %s447 = sand.u32 %s115, 1
        %s448 = smul.addr %s447, 32
        %s449 = scalar_lea.vmem [#allocation6], %s448
        // Predicated region
        $region45: #{tpu_custom_call.1} parent=31 // pred_check
          %p450 = pneg %p125
        $region46: #{tpu_custom_call.1} parent=31 // pred_check_branch
          %452 = sbr.rel (%p450) target = $region48
        $region47: #{tpu_custom_call.1} parent=31 // pred_region
          %s453 = smul.u32 2, %s24
          %s455 = ssub.s32 512, 512
          %456 = vsyncadd %s446, %s455
          %s457 = smul.addr %s453, 128
          %s458 = scalar_lea.hbm %s3, %s457
          %s459 = sshll.u32 %s449, 4
          %s460 = int_to_ptr.vmem [resolvable:$true] %s459
          %465 = dma.vmem_to_hbm [thread:$0]  %s460, 512, %s458, %s446, 256, 512, 16
        $region48: #{tpu_custom_call.1} parent=31 // pred_fallthru
          _
      $region32: #{tpu_custom_call.1} parent=5 // pred_fallthru
        _
      %p466 = scmp.le.s32.totalorder 2, %s15
      // Predicated region
      $region49: #{tpu_custom_call.1} parent=5 // pred_check
        %p467 = pneg %p466
      $region50: #{tpu_custom_call.1} parent=5 // pred_check_branch
        %469 = sbr.rel (%p467) target = $region52
      $region51: #{tpu_custom_call.1} parent=5 // pred_region
        %s470 = ssub.s32 %s15, 2
        // Predicated region
        $region53: #{tpu_custom_call.1} parent=51 // pred_check
          %p471 = pneg %p131
        $region54: #{tpu_custom_call.1} parent=51 // pred_check_branch
          %473 = sbr.rel (%p471) target = $region56
        $region55: #{tpu_custom_call.1} parent=51 // pred_region
          %s474 = sand.u32 %s116, 1
          %s475 = scalar_lea.sflag [#allocation5], %s474
          %s476 = sand.u32 %s116, 1
          %s477 = smul.addr %s476, 32
          %s478 = scalar_lea.vmem [#allocation6], %s477
          %479 = dma.done %s475, 512
        $region56: #{tpu_custom_call.1} parent=51 // pred_fallthru
          _
      $region52: #{tpu_custom_call.1} parent=5 // pred_fallthru
        _
    $region6: #{tpu_custom_call.1} parent=1 // loop_footer
      %s19 = sadd.s32 1, %s15
    $region7: #{tpu_custom_call.1} parent=1 // loop_footer_branch
      %14 = sbr.rel target = $region3
    $region8: #{tpu_custom_call.1} parent=1 // loop_exit
      _
    %480 = vsyncpa [#allocation4], 1
    %s481 = scalar_lea.sflag [#allocation4], 1
    %482 = vsyncpa %s481, 1
    %483 = vsyncpa [#allocation5], 1
    %s484 = scalar_lea.sflag [#allocation5], 1
    %485 = vsyncpa %s484, 1

</llo_original>
